<compile_context>
chip_gen: v6e
topology: v6e:2x2x1
jax: 0.10.0
libtpu: 0.0.40
codegen_flags: <defaults>
</compile_context>

<pallas_src>
import functools
import math

import jax
import jax.numpy as jnp
from jax.experimental import pallas as pl
from jax.experimental.pallas import tpu as pltpu

_LANE = 128
_SUBLANE = 8


def _round_up(x, m):
    return ((x + m - 1) // m) * m


def _vmem_capacity_bytes():
    """Physical VMEM per TensorCore; conservative fallback = v7x (64 MiB)."""
    try:
        cap = int(pltpu.get_tpu_info().vmem_capacity_bytes)
        if cap > 0:
            return cap
    except Exception:
        pass
    return 64 * 1024 * 1024


# --------------------------------------------------------------------------
# Pallas kernel: one K-tile of the negatives logits.
# --------------------------------------------------------------------------
def _moco_kernel(inv_z_ref, q_ref, mem_ref, lneg_ref, *, apply_exp):
    # q is pre-scaled by 1/T in the wrapper (folded into the pad/cast).
    # Negatives: q @ mem_tile.T on the MXU with f32 accumulation.
    l_neg = jax.lax.dot_general(
        q_ref[...], mem_ref[...],
        dimension_numbers=(((1,), (1,)), ((), ())),
        preferred_element_type=jnp.float32)          # (Bp, TK)
    if apply_exp:                                    # NCE branch (no softmax)
        l_neg = jnp.exp(l_neg)
    lneg_ref[...] = (l_neg * inv_z_ref[0]).astype(lneg_ref.dtype)


def _moco_logits(q_pad, memory_padded, inv_z, *, apply_exp, tile_k,
                 vmem_limit):
    Bp, Dp = q_pad.shape
    K128, _ = memory_padded.shape
    grid_k = pl.cdiv(K128, tile_k)        # ragged last tile handled by Pallas
    out_dtype = memory_padded.dtype       # bf16 l_neg: halves HBM write bytes

    kernel = functools.partial(_moco_kernel, apply_exp=apply_exp)

    itm = jnp.dtype(memory_padded.dtype).itemsize
    cost = pl.CostEstimate(
        flops=2 * Bp * K128 * Dp,
        transcendentals=(Bp * K128 if apply_exp else 0),
        bytes_accessed=(K128 * Dp * itm + Bp * Dp * itm
                        + Bp * K128 * jnp.dtype(out_dtype).itemsize + 4))

    return pl.pallas_call(
        kernel,
        out_shape=jax.ShapeDtypeStruct((Bp, K128), out_dtype),
        grid_spec=pltpu.PrefetchScalarGridSpec(
            num_scalar_prefetch=0,
            grid=(grid_k,),
            in_specs=[
                pl.BlockSpec(memory_space=pltpu.MemorySpace.SMEM),  # inv_Z
                pl.BlockSpec((Bp, Dp), lambda j: (0, 0)),           # q (resident)
                pl.BlockSpec((tile_k, Dp), lambda j: (j, 0)),       # queue tile
            ],
            out_specs=pl.BlockSpec((Bp, tile_k), lambda j: (0, j)), # l_neg tile
        ),
        compiler_params=pltpu.CompilerParams(
            dimension_semantics=("parallel",),   # K tiles shard across TCs
            vmem_limit_bytes=vmem_limit),
        cost_estimate=cost,
    )(inv_z, q_pad, memory_padded)


@functools.partial(jax.jit, static_argnames=("T", "apply_exp", "tile_k",
                                             "valid_k", "vmem_limit"))
def _moco_forward(q, k, memory_padded, inv_z, *, T, apply_exp, tile_k,
                  valid_k, vmem_limit):
    B, D = q.shape
    _, Dp = memory_padded.shape
    Bp = _round_up(max(B, _SUBLANE), _SUBLANE)
    cdt = memory_padded.dtype
    inv_t = jnp.float32(1.0 / T)

    # Fold 1/T into q at the pad/cast (removes a per-element mul in-kernel).
    q_pad = jnp.zeros((Bp, Dp), cdt).at[:B, :D].set((q * inv_t).astype(cdt))
    inv_z_arr = jnp.reshape(inv_z, (1,)).astype(jnp.float32)

    l_neg = _moco_logits(q_pad, memory_padded, inv_z_arr,
                         apply_exp=apply_exp, tile_k=tile_k,
                         vmem_limit=vmem_limit)

    # Positive logit: tiny (B x D) row-wise dot, computed in f32 from the
    # original inputs in the wrapper (hoisted out of the Pallas kernel).
    l_pos = jnp.sum(q * k, axis=1, keepdims=True) * inv_t
    if apply_exp:
        l_pos = jnp.exp(l_pos)
    l_pos = l_pos * inv_z_arr[0]

    # final [B, K+1]: positive logit first, then the K negatives (f32 output,
    # matching the PyTorch module's dtype).
    return jnp.concatenate(
        [l_pos.astype(jnp.float32),
         l_neg[:B, :valid_k].astype(jnp.float32)], axis=1)


@functools.partial(jax.jit, static_argnames=("n1", "n2"), donate_argnums=(0,))
def _queue_update(memory_padded, k_new, start, *, n1, n2):
    """index_copy_ of a contiguous row range (at most one wrap) via DUS."""
    Dp = memory_padded.shape[1]
    D = k_new.shape[1]
    rows = jnp.zeros((k_new.shape[0], Dp), memory_padded.dtype)
    rows = rows.at[:, :D].set(k_new.astype(memory_padded.dtype))
    mem = jax.lax.dynamic_update_slice(memory_padded, rows[:n1],
                                       (start, jnp.int32(0)))
    if n2 > 0:  # wrap-around tail
        mem = jax.lax.dynamic_update_slice(mem, rows[n1:n1 + n2],
                                           (jnp.int32(0), jnp.int32(0)))
    return mem


class MemoryMoCo:
    """Fixed-size queue with momentum encoder (JAX / Pallas TPU port)."""

    def __init__(self, inputSize, outputSize, K, T=0.07, use_softmax=False,
                 seed=0, dtype=jnp.bfloat16, max_tile_k=None):
        self.outputSize = outputSize
        self.inputSize = inputSize
        self.queueSize = K
        self.T = T
        self.index = 0
        self.use_softmax = use_softmax
        self.Z = -1.0   # mirrors register_buffer('params', tensor([-1]))
        self._dtype = jnp.dtype(dtype)
        self._max_tile_k = max_tile_k
        self._tile_cache = {}

        # Queue geometry: features (lanes) padded to 128, rows only to the
        # next 128 multiple (<=127 rows of padding; no tile_k-sized tail).
        Dp = _round_up(inputSize, _LANE)
        K128 = _round_up(K, _LANE)

        # torch.rand(K, D).mul_(2*stdv).add_(-stdv) == uniform(-stdv, stdv)
        stdv = 1.0 / math.sqrt(inputSize / 3)
        key = jax.random.PRNGKey(seed)
        init = jax.random.uniform(key, (K, inputSize), dtype=jnp.float32,
                                  minval=-stdv, maxval=stdv)
        mem = jnp.zeros((K128, Dp), self._dtype)
        self._memory = mem.at[:K, :inputSize].set(init.astype(self._dtype))
        # TODO(synk): optional further byte win: store the queue int8 (v5e/v6e)
        # or fp8 (v7x) with a per-row scale dequantized in the kernel epilogue.
        print('using queue shape: ({},{})'.format(self.queueSize, inputSize))

    @property
    def memory(self):
        # Logical [K, D] view of the (padded, bf16) queue, as f32.
        return self._memory[:self.queueSize, :self.inputSize].astype(jnp.float32)

    def _tiling(self, Bp):
        """tile_k + vmem_limit sized from the full per-step VMEM footprint."""
        if Bp in self._tile_cache:
            return self._tile_cache[Bp]
        K128, Dp = self._memory.shape
        mem_itm = self._dtype.itemsize
        out_itm = self._dtype.itemsize          # l_neg emitted in queue dtype
        cap = _vmem_capacity_bytes()
        budget = int(cap * 0.6)                 # headroom for compiler scratch

        fixed = 2 * Bp * Dp * mem_itm + (1 << 20)            # resident q + slack
        per_row = 2 * Dp * mem_itm + 2 * Bp * out_itm        # queue + out (x2 bufs)
        tk = max(_LANE, (budget - fixed) // per_row)
        # Cap a single queue-tile DMA at ~16 MiB (amortizes ~0.35us step
        # overhead on v6e/v7x without monopolizing VMEM / grid parallelism).
        tk = min(tk, max(_LANE, (16 << 20) // (Dp * mem_itm)))
        if self._max_tile_k is not None:
            tk = min(tk, self._max_tile_k)
        tk = max(_LANE, (tk // _LANE) * _LANE)
        tk = min(tk, K128)

        needed = fixed + tk * per_row
        vmem_limit = int(min(cap, max(needed + (8 << 20), 32 << 20)))
        self._tile_cache[Bp] = (int(tk), vmem_limit)
        return self._tile_cache[Bp]

    def forward(self, q, k):
        batchSize = q.shape[0]
        k = jax.lax.stop_gradient(k)
        # TODO(synk): pallas_call has no autodiff rule; training-time gradients
        # w.r.t. q would require wrapping this forward in jax.custom_vjp.

        apply_exp = not self.use_softmax
        if self.use_softmax or self.Z < 0:
            inv_z = 1.0
        else:
            inv_z = 1.0 / self.Z

        Bp = _round_up(max(batchSize, _SUBLANE), _SUBLANE)
        tile_k, vmem_limit = self._tiling(Bp)

        out = _moco_forward(q, k, self._memory, jnp.float32(inv_z),
                            T=float(self.T), apply_exp=apply_exp,
                            tile_k=tile_k, valid_k=self.queueSize,
                            vmem_limit=vmem_limit)

        if (not self.use_softmax) and self.Z < 0:
            # First call: out holds exp(logits/T); set Z from this batch
            # (host sync, faithful to the PyTorch .item() behaviour).
            self.Z = float(jnp.mean(out) * self.outputSize)
            print('normalization constant Z is set to {:.1f}'.format(self.Z))
            out = out / self.Z
        out = jnp.squeeze(out)   # matches torch's .squeeze()

        # Queue update (no grad): memory.index_copy_(0, ids, k). The index
        # range is contiguous with at most one wrap, so it is one or two
        # dynamic_update_slice calls on the donated (in-place) queue buffer.
        n1 = min(batchSize, self.queueSize - self.index)
        n2 = batchSize - n1
        self._memory = _queue_update(self._memory, k,
                                     jnp.int32(self.index), n1=n1, n2=n2)
        self.index = (self.index + batchSize) % self.queueSize
        return out

    __call__ = forward


if __name__ == "__main__":
    # Small shapes: batch=8, feature dim=32, queue size K=128, dataset size 1000
    B, D, K = 8, 32, 128
    moco = MemoryMoCo(inputSize=D, outputSize=1000, K=K, T=0.07,
                      use_softmax=False, seed=0)

    key = jax.random.PRNGKey(0)
    kq, kk = jax.random.split(key)
    q = jax.random.normal(kq, (B, D), dtype=jnp.float32)
    q = q / jnp.linalg.norm(q, axis=1, keepdims=True)
    k = jax.random.normal(kk, (B, D), dtype=jnp.float32)
    k = k / jnp.linalg.norm(k, axis=1, keepdims=True)

    out = jax.block_until_ready(moco(q, k))
    assert out.shape == (B, K + 1), out.shape

    # Second call exercises the "Z already set" (fully fused 1/Z) path and the
    # updated queue.
    out2 = jax.block_until_ready(moco(q, k))
    assert out2.shape == (B, K + 1)

    # use_softmax branch with a multi-tile grid (K=384, forced tile_k=128 ->
    # 3 K-tiles streamed / sharded across cores), checked against a JAX
    # reference computed from the (dequantized) queue; generous bf16 tolerance.
    moco_sm = MemoryMoCo(inputSize=D, outputSize=1000, K=384, T=0.07,
                         use_softmax=True, seed=1, max_tile_k=128)
    mem_before = moco_sm.memory
    out3 = jax.block_until_ready(moco_sm(q, k))
    assert out3.shape == (B, 384 + 1), out3.shape
    ref = jnp.concatenate(
        [jnp.sum(q * k, axis=1, keepdims=True), q @ mem_before.T],
        axis=1) / moco_sm.T
    assert jnp.allclose(out3, ref, rtol=5e-2, atol=1e-1), \
        float(jnp.max(jnp.abs(out3 - ref)))

    # Wrap-around queue update path (two dynamic_update_slice calls).
    moco_sm.index = 380
    out4 = jax.block_until_ready(moco_sm(q, k))
    assert out4.shape == (B, 384 + 1)

    print("KERNEL_OK")
</pallas_src>

<mosaic_0001>
module attributes {stable_mosaic.version = 11 : i64} {
  func.func @_moco_kernel(%arg0: i32, %arg1: memref<1xf32, #tpu.memory_space<smem>>, %arg2: memref<8x128xbf16, #tpu.memory_space<vmem>>, %arg3: memref<128x128xbf16, #tpu.memory_space<vmem>>, %arg4: memref<8x128xbf16, #tpu.memory_space<vmem>>) attributes {dimension_semantics = [#tpu.dimension_semantics<parallel>], iteration_bounds = array<i64: 1>, scalar_prefetch = 0 : i64, scratch_operands = 0 : i64, tpu.core_type = #tpu.core_type<tc>, window_params = [{transform_indices = @transform_0, window_bounds = array<i64: 1>}, {pipeline_mode = #tpu.pipeline_mode<synchronous>, transform_indices = @transform_1, window_bounds = array<i64: 8, 128>}, {transform_indices = @transform_2, window_bounds = array<i64: 128, 128>}, {transform_indices = @transform_3, window_bounds = array<i64: 8, 128>}]} {
    %c0 = arith.constant 0 : index
    %c0_0 = arith.constant 0 : index
    %0 = vector.load %arg2[%c0, %c0_0] : memref<8x128xbf16, #tpu.memory_space<vmem>>, vector<8x128xbf16>
    %c0_1 = arith.constant 0 : index
    %c0_2 = arith.constant 0 : index
    %1 = vector.load %arg3[%c0_1, %c0_2] : memref<128x128xbf16, #tpu.memory_space<vmem>>, vector<128x128xbf16>
    %cst = arith.constant dense<0.000000e+00> : vector<8x128xf32>
    %2 = tpu.matmul %0, %1, %cst {dimension_numbers = #tpu.dot_dimension_numbers<[1], [1], [0], [0], [0, 0, 1, 0], [], []>} : vector<8x128xbf16>, vector<128x128xbf16>, vector<8x128xf32> -> vector<8x128xf32>
    %3 = math.exp %2 : vector<8x128xf32>
    %c0_3 = arith.constant 0 : index
    %4 = memref.load %arg1[%c0_3] : memref<1xf32, #tpu.memory_space<smem>>
    %5 = vector.broadcast %4 : f32 to vector<8x128xf32>
    %6 = arith.mulf %3, %5 : vector<8x128xf32>
    %7 = arith.truncf %6 : vector<8x128xf32> to vector<8x128xbf16>
    %c0_4 = arith.constant 0 : index
    %c0_5 = arith.constant 0 : index
    %8 = vector.load %arg4[%c0_4, %c0_5] : memref<8x128xbf16, #tpu.memory_space<vmem>>, vector<8x128xbf16>
    tpu.vector_store %arg4[%c0_4, %c0_5], %7 {strides = array<i32>} : memref<8x128xbf16, #tpu.memory_space<vmem>>, vector<8x128xbf16>,
    return
  }
  func.func @transform_0(%arg0: i32) -> i32 {
    %c0_i32 = arith.constant 0 : i32
    %c0_i32_0 = arith.constant 0 : i32
    return %c0_i32 : i32
  }
  func.func @transform_1(%arg0: i32) -> (i32, i32) {
    %c0_i32 = arith.constant 0 : i32
    %c0_i32_0 = arith.constant 0 : i32
    %c0_i32_1 = arith.constant 0 : i32
    return %c0_i32, %c0_i32_0 : i32, i32
  }
  func.func @transform_2(%arg0: i32) -> (i32, i32) {
    %c0_i32 = arith.constant 0 : i32
    %c0_i32_0 = arith.constant 0 : i32
    return %arg0, %c0_i32 : i32, i32
  }
  func.func @transform_3(%arg0: i32) -> (i32, i32) {
    %c0_i32 = arith.constant 0 : i32
    %c0_i32_0 = arith.constant 0 : i32
    return %c0_i32, %arg0 : i32, i32
  }
}

</mosaic_0001>

<llo_original>
// kernel: _moco_forward.1
$region0: #{_moco_forward.1}
  #allocation0 [shape = 'u32[]', space=smem, size = 0x4, offset = 0x4, fixed_abs, tag = 'smem constant byte address 0x4 - core index']
  #allocation1 [shape = 'u32[144,128]{1,0:T(1,128)}', space=vmem, size = 0x12000, scoped, tag = 'internal scratch']
  #allocation2 [shape = 'f32[1]{0:T(128)S(6)}', space=smem, size = 0x200, scoped, tag = 'scoped memory for _moco_forward.1']
  %s0 = inlined_call_operand.<no memory space> [shape: f32[1], index: 0, kind: input, shape index: {}]
  %s1 = inlined_call_operand.vmem [shape: bf16[8,128], index: 1, kind: input, shape index: {}]
  %s2 = inlined_call_operand.hbm [shape: bf16[128,128], index: 2, kind: input, shape index: {}]
  %s3 = inlined_call_operand.vmem [shape: bf16[8,128], index: 3, kind: output, shape index: {}]
  %s4 = sld [smem:[#allocation0]]
  $region26: #{_moco_forward.1} parent=0
    _
  %s6 = ssub.s32 1, %s4
  %s7 = scalar_select 0, %s6, %s4
  %8 = sst [smem:[#allocation2]] %s0
  $region1: #{_moco_forward.1} parent=0
    #allocation3 [shape = 'u8[32768]{0}', space=vmem, size = 0x8000, scoped, tag = 'input window, operand 2, single buffered']
    #allocation4 [shape = 's32[1]{0}', space=sflag, size = 0x4, scoped, tag = 'scoped memory for _moco_forward.1']
    %9 = vsyncpa [#allocation4], 0
    // Predicated region
    $region2: #{_moco_forward.1} parent=1 // pred_check
      _
    $region3: #{_moco_forward.1} parent=1 // pred_check_branch
      %11 = sbr.rel (0) target = $region5
    $region4: #{_moco_forward.1} parent=1 // pred_region
      _
    $region5: #{_moco_forward.1} parent=1 // pred_fallthru
      _
    // Predicated region
    $region6: #{_moco_forward.1} parent=1 // pred_check
      _
    $region7: #{_moco_forward.1} parent=1 // pred_check_branch
      %13 = sbr.rel (0) target = $region9
    $region8: #{_moco_forward.1} parent=1 // pred_region
      _
    $region9: #{_moco_forward.1} parent=1 // pred_fallthru
      _
    // Predicated region
    $region10: #{_moco_forward.1} parent=1 // pred_check
      _
    $region11: #{_moco_forward.1} parent=1 // pred_check_branch
      %15 = sbr.rel (0) target = $region13
    $region12: #{_moco_forward.1} parent=1 // pred_region
      %s17 = ssub.s32 1024, 1024
      %18 = vsyncadd [#allocation4], %s17
      %s19 = sshll.u32 [#allocation3], 4
      %s20 = int_to_ptr.vmem [resolvable:$true] %s19
      %25 = dma.hbm_to_vmem [thread:$0]  %s2, 1024, %s20, [#allocation4], 64, 64, 4
    $region13: #{_moco_forward.1} parent=1 // pred_fallthru
      _
    // Predicated region
    $region14: #{_moco_forward.1} parent=1 // pred_check
      _
    $region15: #{_moco_forward.1} parent=1 // pred_check_branch
      %27 = sbr.rel (0) target = $region17
    $region16: #{_moco_forward.1} parent=1 // pred_region
      %28 = dma.done [#allocation4], 1024
    $region17: #{_moco_forward.1} parent=1 // pred_fallthru
      _
    %v30 = vld [vmem:[%s1] sm:$0xf]
    %v31 = vld [vmem:[#allocation3] sm:$0xf]
    %v32 = vld [vmem:[#allocation3 + $0x4] sm:$0xf]
    %v33 = vld [vmem:[#allocation3 + $0x8] sm:$0xf]
    %v34 = vld [vmem:[#allocation3 + $0xc] sm:$0xf]
    %v35 = vld [vmem:[#allocation3 + $0x10] sm:$0xf]
    %v36 = vld [vmem:[#allocation3 + $0x14] sm:$0xf]
    %v37 = vld [vmem:[#allocation3 + $0x18] sm:$0xf]
    %v38 = vld [vmem:[#allocation3 + $0x1c] sm:$0xf]
    %v39 = vld [vmem:[#allocation3 + $0x20] sm:$0xf]
    %v40 = vld [vmem:[#allocation3 + $0x24] sm:$0xf]
    %v41 = vld [vmem:[#allocation3 + $0x28] sm:$0xf]
    %v42 = vld [vmem:[#allocation3 + $0x2c] sm:$0xf]
    %v43 = vld [vmem:[#allocation3 + $0x30] sm:$0xf]
    %v44 = vld [vmem:[#allocation3 + $0x34] sm:$0xf]
    %v45 = vld [vmem:[#allocation3 + $0x38] sm:$0xf]
    %v46 = vld [vmem:[#allocation3 + $0x3c] sm:$0xf]
    %v63 = vunpack.c.l.b16 %v31
    %v64 = vunpack.c.l.b16 %v32
    %v65 = vunpack.c.l.b16 %v33
    %v66 = vunpack.c.l.b16 %v34
    %v67 = vunpack.c.l.b16 %v35
    %v68 = vunpack.c.l.b16 %v36
    %v69 = vunpack.c.l.b16 %v37
    %v70 = vunpack.c.l.b16 %v38
    %v71 = vunpack.c.l.b16 %v39
    %v72 = vunpack.c.l.b16 %v40
    %v73 = vunpack.c.l.b16 %v41
    %v74 = vunpack.c.l.b16 %v42
    %v75 = vunpack.c.l.b16 %v43
    %v76 = vunpack.c.l.b16 %v44
    %v77 = vunpack.c.l.b16 %v45
    %v78 = vunpack.c.l.b16 %v46
    %v79 = vpack.c.b16 %v64, %v63
    %v80 = vpack.c.b16 %v66, %v65
    %v81 = vpack.c.b16 %v68, %v67
    %v82 = vpack.c.b16 %v70, %v69
    %v83 = vpack.c.b16 %v72, %v71
    %v84 = vpack.c.b16 %v74, %v73
    %v85 = vpack.c.b16 %v76, %v75
    %v86 = vpack.c.b16 %v78, %v77
    %95 = vmatprep.subr.bf16.mxu0 0
    %96 = vmatpush1.bf16.xpose.msra.mxu0 %v86
    %97 = vmatprep.subr.bf16.mxu0 0
    %98 = vmatpush1.bf16.xpose.msra.mxu0 %v85
    %99 = vmatprep.subr.bf16.mxu0 0
    %100 = vmatpush1.bf16.xpose.msra.mxu0 %v84
    %101 = vmatprep.subr.bf16.mxu0 0
    %102 = vmatpush1.bf16.xpose.msra.mxu0 %v83
    %103 = vmatprep.subr.bf16.mxu0 0
    %104 = vmatpush1.bf16.xpose.msra.mxu0 %v82
    %105 = vmatprep.subr.bf16.mxu0 0
    %106 = vmatpush1.bf16.xpose.msra.mxu0 %v81
    %107 = vmatprep.subr.bf16.mxu0 0
    %108 = vmatpush1.bf16.xpose.msra.mxu0 %v80
    %109 = vmatprep.subr.bf16.mxu0 0
    %110 = vmatpush1.bf16.xpose.msra.mxu0 %v79
    %111 = vmatprep.subr.bf16.mxu0 0
    %112 = vmatpush2.bf16.xpose.msra.mxu0 0
    %113 = vmatprep.subr.bf16.mxu0 0
    %114 = vmatpush2.bf16.xpose.msra.mxu0 0
    %115 = vmatprep.subr.bf16.mxu0 0
    %116 = vmatpush2.bf16.xpose.msra.mxu0 0
    %117 = vmatprep.subr.bf16.mxu0 0
    %118 = vmatpush2.bf16.xpose.msra.mxu0 0
    %119 = vmatprep.subr.bf16.mxu0 0
    %120 = vmatpush2.bf16.xpose.msra.mxu0 0
    %121 = vmatprep.subr.bf16.mxu0 0
    %122 = vmatpush2.bf16.xpose.msra.mxu0 0
    %123 = vmatprep.subr.bf16.mxu0 0
    %124 = vmatpush2.bf16.xpose.msra.mxu0 0
    %125 = vmatprep.subr.bf16.mxu0 0
    %126 = vmatpush2.bf16.xpose.msra.mxu0 0
    %127 = vmatprep.mubr.bf16.mxu0 0
    %128 = vmatmul.mubr.bf16.gmra.mxu0 %v30
    %v129 = vpop.f32.mrf.mxu0
    %v130 = vadd.f32 0.0, %v129
    %v131 = vpop.f32.mrf.mxu0
    %v132 = vpop.f32.mrf.mxu0
    %v133 = vpop.f32.mrf.mxu0
    %134 = vdwg.mxu0
    %v135 = vmul.f32 %v130, 1.442695
    %v136 = vpow.pop %v135
    %s137 = sld [smem:[#allocation2]]
    %v138 = vstv %s137
    %v139 = vmul.f32 %v136, %v138
    %v140 = vpack.c.bf16 %v139, %v139
    %141 = vst [vmem:[%s3] sm:$0xf] %v140
    // Predicated region
    $region18: #{_moco_forward.1} parent=1 // pred_check
      _
    $region19: #{_moco_forward.1} parent=1 // pred_check_branch
      %143 = sbr.rel (0) target = $region21
    $region20: #{_moco_forward.1} parent=1 // pred_region
      _
    $region21: #{_moco_forward.1} parent=1 // pred_fallthru
      _
    // Predicated region
    $region22: #{_moco_forward.1} parent=1 // pred_check
      _
    $region23: #{_moco_forward.1} parent=1 // pred_check_branch
      %145 = sbr.rel (0) target = $region25
    $region24: #{_moco_forward.1} parent=1 // pred_region
      _
    $region25: #{_moco_forward.1} parent=1 // pred_fallthru
      _
    %146 = vsyncpa [#allocation4], 1

</llo_original>
